<compile_context>
chip_gen: v7x
topology: tpu7x:2x2x1
jax: 0.10.0
libtpu: 0.0.40
codegen_flags: <defaults>
</compile_context>

<pallas_src>
from functools import partial

import jax
import jax.numpy as jnp
from jax.experimental import pallas as pl
from jax.experimental.pallas import tpu as pltpu


def _round_up(v, m):
    return ((v + m - 1) // m) * m


def _pick_tile_n(seq_len, dim, itemsize,
                 target_rows=512, x_budget_bytes=24 * 1024 * 1024):
    """Largest divisor of seq_len that fits the row target and the
    double-buffered activation budget (keeps every tile inside one batch).
    Prefers multiples of 8 for sublane alignment."""
    max_rows = max(1, min(target_rows, x_budget_bytes // max(1, 2 * dim * itemsize)))
    max_rows = min(max_rows, seq_len)
    best, best8 = 1, 0
    for t in range(1, max_rows + 1):
        if seq_len % t == 0:
            best = t
            if t % 8 == 0:
                best8 = t
    return best8 if best8 else best


def moe_gate_kernel(x_ref, w_ref, idx_ref, val_ref, cnt_ref, ssum_ref, *,
                    num_experts, top_k, k_pad):
    tile_n = x_ref.shape[0]
    e_pad = w_ref.shape[1]

    # ---- gating logits: MXU matmul in native dtype, f32 accumulation ----
    logits = jnp.dot(x_ref[...], w_ref[...], preferred_element_type=jnp.float32)

    eidx = jax.lax.broadcasted_iota(jnp.int32, (tile_n, e_pad), 1)
    logits = jnp.where(eidx < num_experts, logits, -jnp.inf)  # mask padded experts

    # ---- softmax (f32); per-row EUP reciprocal instead of an (N,E) divide ----
    m = jnp.max(logits, axis=-1, keepdims=True)
    ex = jnp.exp(logits - m)                                   # padded lanes -> 0
    inv_denom = pl.reciprocal(jnp.sum(ex, axis=-1, keepdims=True), approx=True)
    scores = ex * inv_denom                                    # (tile_n, e_pad)

    # ---- top-k via iterative argmax (k small & static) ----
    # tie-break = lowest expert index (matches torch.topk / lax.top_k);
    # the one-hot histogram accumulation is folded into the same loop.
    work = scores
    idx_cols, val_cols = [], []
    onehot_sum = jnp.zeros((tile_n, e_pad), jnp.float32)
    for _ in range(top_k):
        vmax = jnp.max(work, axis=-1, keepdims=True)                      # (T,1)
        sel = jnp.min(jnp.where(work == vmax, eidx, e_pad),
                      axis=-1, keepdims=True)                             # (T,1)
        onehot = eidx == sel
        onehot_sum = onehot_sum + onehot.astype(jnp.float32)
        idx_cols.append(sel)
        val_cols.append(vmax)
        work = jnp.where(onehot, -jnp.inf, work)

    # ---- pad top-k columns to k_pad for aligned stores (sliced in wrapper) ----
    n_pad = k_pad - top_k
    idx_cols += [jnp.zeros((tile_n, 1), jnp.int32)] * n_pad
    val_cols += [jnp.zeros((tile_n, 1), jnp.float32)] * n_pad
    idx_ref[...] = jnp.concatenate(idx_cols, axis=1)
    val_ref[...] = jnp.concatenate(val_cols, axis=1)

    # ---- per-tile partial sums for the aux loss (tile lies in one batch) ----
    cnt_ref[0] = jnp.sum(onehot_sum, axis=0, keepdims=True)    # (1, e_pad)
    ssum_ref[0] = jnp.sum(scores, axis=0, keepdims=True)       # (1, e_pad)


def moe_gate(x, weight, *, top_k=6, aux_loss_alpha=0.001):
    """JAX/Pallas equivalent of MoEGate.forward.

    x:      (bsz, seq_len, dim)
    weight: (num_experts, dim)   (nn.Linear weight, no bias)
    returns (topk_indices (N,k) int32, topk_weight (N,k) float32, aux_loss scalar)
    """
    bsz, seq_len, dim = x.shape
    num_experts = weight.shape[0]
    N = bsz * seq_len

    e_pad = _round_up(num_experts, 128)      # lane-dense expert axis
    k_pad = _round_up(top_k, 8)              # sublane-aligned top-k columns

    itemsize = jnp.dtype(x.dtype).itemsize
    tile_n = _pick_tile_n(seq_len, dim, itemsize)
    num_tiles = N // tile_n
    tiles_per_batch = seq_len // tile_n

    x_flat = x.reshape(N, dim)
    w_t = weight.T                           # (dim, num_experts)
    if e_pad != num_experts:
        w_t = jnp.pad(w_t, ((0, 0), (0, e_pad - num_experts)))

    kernel = partial(moe_gate_kernel, num_experts=num_experts,
                     top_k=top_k, k_pad=k_pad)

    idx, val, cnt_part, ssum_part = pl.pallas_call(
        kernel,
        grid=(num_tiles,),
        in_specs=[
            pl.BlockSpec((tile_n, dim), lambda i: (i, 0)),    # pipelined rows
            pl.BlockSpec((dim, e_pad), lambda i: (0, 0)),     # resident weight
        ],
        out_specs=(
            pl.BlockSpec((tile_n, k_pad), lambda i: (i, 0)),
            pl.BlockSpec((tile_n, k_pad), lambda i: (i, 0)),
            pl.BlockSpec((1, 1, e_pad), lambda i: (i, 0, 0)),
            pl.BlockSpec((1, 1, e_pad), lambda i: (i, 0, 0)),
        ),
        out_shape=(
            jax.ShapeDtypeStruct((N, k_pad), jnp.int32),
            jax.ShapeDtypeStruct((N, k_pad), jnp.float32),
            jax.ShapeDtypeStruct((num_tiles, 1, e_pad), jnp.float32),
            jax.ShapeDtypeStruct((num_tiles, 1, e_pad), jnp.float32),
        ),
        compiler_params=pltpu.CompilerParams(
            dimension_semantics=("parallel",),
            vmem_limit_bytes=48 * 1024 * 1024,
        ),
    )(x_flat, w_t)

    topk_idx = idx[:, :top_k]
    topk_w = val[:, :top_k]

    # Tiny O(bsz * E) final reduction in plain JAX (keeps the grid axis
    # "parallel"; no cross-grid accumulator inside the kernel).
    cnt = cnt_part.reshape(bsz, tiles_per_batch, e_pad).sum(axis=1)[:, :num_experts]
    ssum = ssum_part.reshape(bsz, tiles_per_batch, e_pad).sum(axis=1)[:, :num_experts]
    ce = cnt * (num_experts / (seq_len * top_k))
    mean_scores = ssum / seq_len
    aux_loss = (ce * mean_scores).sum(axis=1).mean() * aux_loss_alpha
    return topk_idx, topk_w, aux_loss


if __name__ == "__main__":
    key = jax.random.PRNGKey(0)
    bsz, seq_len, dim = 2, 8, 32
    num_experts, top_k = 32, 6
    alpha = 0.001

    kx, kw = jax.random.split(key)
    x = jax.random.normal(kx, (bsz, seq_len, dim), jnp.float32)
    # deterministic nn.Linear-style init: U(-1/sqrt(dim), 1/sqrt(dim)), shape (E, dim)
    bound = 1.0 / (dim ** 0.5)
    weight = jax.random.uniform(kw, (num_experts, dim), jnp.float32, -bound, bound)

    topk_idx, topk_w, aux_loss = moe_gate(x, weight, top_k=top_k,
                                          aux_loss_alpha=alpha)
    jax.block_until_ready((topk_idx, topk_w, aux_loss))

    # ---- pure-JAX reference check ----
    logits = x.reshape(-1, dim) @ weight.T
    scores = jax.nn.softmax(logits.astype(jnp.float32), axis=-1)
    ref_val, ref_idx = jax.lax.top_k(scores, top_k)
    assert bool((topk_idx == ref_idx).all()), "topk indices mismatch"
    # approx=True reciprocal => allow a small tolerance on the weights
    assert jnp.allclose(topk_w, ref_val, atol=2e-3), "topk values mismatch"

    batch_ids = jnp.repeat(jnp.arange(bsz), seq_len * top_k)
    expert_ids = ref_idx.reshape(-1)
    counts = jnp.zeros((bsz, num_experts)).at[batch_ids, expert_ids].add(1.0)
    ce = counts / (seq_len * top_k / num_experts)
    ref_aux = (ce * scores.reshape(bsz, seq_len, -1).mean(axis=1)).sum(axis=1).mean() * alpha
    assert jnp.allclose(aux_loss, ref_aux, rtol=5e-3, atol=1e-9), "aux loss mismatch"

    print("KERNEL_OK")
</pallas_src>

<mosaic_0001>
module attributes {stable_mosaic.version = 11 : i64} {
  func.func @moe_gate_kernel(%arg0: i32, %arg1: memref<8x32xf32, #tpu.memory_space<vmem>>, %arg2: memref<32x128xf32, #tpu.memory_space<vmem>>, %arg3: memref<8x8xi32, #tpu.memory_space<vmem>>, %arg4: memref<8x8xf32, #tpu.memory_space<vmem>>, %arg5: memref<1x1x128xf32, #tpu.memory_space<vmem>>, %arg6: memref<1x1x128xf32, #tpu.memory_space<vmem>>) attributes {dimension_semantics = [#tpu.dimension_semantics<parallel>], iteration_bounds = array<i64: 2>, scalar_prefetch = 0 : i64, scratch_operands = 0 : i64, tpu.core_type = #tpu.core_type<tc>, window_params = [{transform_indices = @transform_0, window_bounds = array<i64: 8, 32>}, {pipeline_mode = #tpu.pipeline_mode<synchronous>, transform_indices = @transform_1, window_bounds = array<i64: 32, 128>}, {transform_indices = @transform_2, window_bounds = array<i64: 8, 8>}, {transform_indices = @transform_3, window_bounds = array<i64: 8, 8>}, {transform_indices = @transform_4, window_bounds = array<i64: 1, 1, 128>}, {transform_indices = @transform_5, window_bounds = array<i64: 1, 1, 128>}]} {
    %c0 = arith.constant 0 : index
    %c0_0 = arith.constant 0 : index
    %0 = vector.load %arg1[%c0, %c0_0] : memref<8x32xf32, #tpu.memory_space<vmem>>, vector<8x32xf32>
    %c0_1 = arith.constant 0 : index
    %c0_2 = arith.constant 0 : index
    %1 = vector.load %arg2[%c0_1, %c0_2] : memref<32x128xf32, #tpu.memory_space<vmem>>, vector<32x128xf32>
    %cst = arith.constant dense<0.000000e+00> : vector<8x128xf32>
    %2 = tpu.matmul %0, %1, %cst {dimension_numbers = #tpu.dot_dimension_numbers<[1], [0], [0], [1], [0, 0, 1, 1], [], []>} : vector<8x32xf32>, vector<32x128xf32>, vector<8x128xf32> -> vector<8x128xf32>
    %3 = tpu.iota {dimensions = array<i32: 1>} : vector<8x128xi32>
    %c32_i32 = arith.constant 32 : i32
    %4 = vector.broadcast %c32_i32 : i32 to vector<8x128xi32>
    %5 = arith.cmpi slt, %3, %4 : vector<8x128xi32>
    %cst_3 = arith.constant 0xFF800000 : f32
    %6 = vector.broadcast %cst_3 : f32 to vector<8x128xf32>
    %7 = arith.select %5, %2, %6 : vector<8x128xi1>, vector<8x128xf32>
    %cst_4 = arith.constant dense<0xFF800000> : vector<8xf32>
    %8 = vector.multi_reduction <maximumf>, %7, %cst_4 [1] : vector<8x128xf32> to vector<8xf32>
    %9 = vector.shape_cast %8 : vector<8xf32> to vector<8x1xf32>
    %10 = vector.broadcast %9 : vector<8x1xf32> to vector<8x128xf32>
    %11 = arith.subf %7, %10 : vector<8x128xf32>
    %12 = math.exp %11 : vector<8x128xf32>
    %cst_5 = arith.constant dense<0.000000e+00> : vector<8xf32>
    %13 = vector.multi_reduction <add>, %12, %cst_5 [1] : vector<8x128xf32> to vector<8xf32>
    %14 = vector.shape_cast %13 : vector<8xf32> to vector<8x1xf32>
    %15 = tpu.reciprocal %14 {approx = true} : vector<8x1xf32> -> vector<8x1xf32>
    %16 = vector.broadcast %15 : vector<8x1xf32> to vector<8x128xf32>
    %17 = arith.mulf %12, %16 : vector<8x128xf32>
    %cst_6 = arith.constant 0.000000e+00 : f32
    %18 = vector.broadcast %cst_6 : f32 to vector<8x128xf32>
    %cst_7 = arith.constant dense<0xFF800000> : vector<8xf32>
    %19 = vector.multi_reduction <maximumf>, %17, %cst_7 [1] : vector<8x128xf32> to vector<8xf32>
    %20 = vector.shape_cast %19 : vector<8xf32> to vector<8x1xf32>
    %21 = vector.broadcast %20 : vector<8x1xf32> to vector<8x128xf32>
    %22 = arith.cmpf oeq, %17, %21 : vector<8x128xf32>
    %c128_i32 = arith.constant 128 : i32
    %23 = vector.broadcast %c128_i32 : i32 to vector<8x128xi32>
    %24 = arith.select %22, %3, %23 : vector<8x128xi1>, vector<8x128xi32>
    %cst_8 = arith.constant dense<2147483647> : vector<8xi32>
    %25 = vector.multi_reduction <minsi>, %24, %cst_8 [1] : vector<8x128xi32> to vector<8xi32>
    %26 = vector.shape_cast %25 : vector<8xi32> to vector<8x1xi32>
    %27 = vector.broadcast %26 : vector<8x1xi32> to vector<8x128xi32>
    %28 = arith.cmpi eq, %3, %27 : vector<8x128xi32>
    %29 = arith.extui %28 : vector<8x128xi1> to vector<8x128xi32>
    %30 = arith.sitofp %29 : vector<8x128xi32> to vector<8x128xf32>
    %31 = arith.addf %18, %30 : vector<8x128xf32>
    %cst_9 = arith.constant 0xFF800000 : f32
    %32 = vector.broadcast %cst_9 : f32 to vector<8x128xf32>
    %33 = arith.select %28, %32, %17 : vector<8x128xi1>, vector<8x128xf32>
    %cst_10 = arith.constant dense<0xFF800000> : vector<8xf32>
    %34 = vector.multi_reduction <maximumf>, %33, %cst_10 [1] : vector<8x128xf32> to vector<8xf32>
    %35 = vector.shape_cast %34 : vector<8xf32> to vector<8x1xf32>
    %36 = vector.broadcast %35 : vector<8x1xf32> to vector<8x128xf32>
    %37 = arith.cmpf oeq, %33, %36 : vector<8x128xf32>
    %c128_i32_11 = arith.constant 128 : i32
    %38 = vector.broadcast %c128_i32_11 : i32 to vector<8x128xi32>
    %39 = arith.select %37, %3, %38 : vector<8x128xi1>, vector<8x128xi32>
    %cst_12 = arith.constant dense<2147483647> : vector<8xi32>
    %40 = vector.multi_reduction <minsi>, %39, %cst_12 [1] : vector<8x128xi32> to vector<8xi32>
    %41 = vector.shape_cast %40 : vector<8xi32> to vector<8x1xi32>
    %42 = vector.broadcast %41 : vector<8x1xi32> to vector<8x128xi32>
    %43 = arith.cmpi eq, %3, %42 : vector<8x128xi32>
    %44 = arith.extui %43 : vector<8x128xi1> to vector<8x128xi32>
    %45 = arith.sitofp %44 : vector<8x128xi32> to vector<8x128xf32>
    %46 = arith.addf %31, %45 : vector<8x128xf32>
    %cst_13 = arith.constant 0xFF800000 : f32
    %47 = vector.broadcast %cst_13 : f32 to vector<8x128xf32>
    %48 = arith.select %43, %47, %33 : vector<8x128xi1>, vector<8x128xf32>
    %cst_14 = arith.constant dense<0xFF800000> : vector<8xf32>
    %49 = vector.multi_reduction <maximumf>, %48, %cst_14 [1] : vector<8x128xf32> to vector<8xf32>
    %50 = vector.shape_cast %49 : vector<8xf32> to vector<8x1xf32>
    %51 = vector.broadcast %50 : vector<8x1xf32> to vector<8x128xf32>
    %52 = arith.cmpf oeq, %48, %51 : vector<8x128xf32>
    %c128_i32_15 = arith.constant 128 : i32
    %53 = vector.broadcast %c128_i32_15 : i32 to vector<8x128xi32>
    %54 = arith.select %52, %3, %53 : vector<8x128xi1>, vector<8x128xi32>
    %cst_16 = arith.constant dense<2147483647> : vector<8xi32>
    %55 = vector.multi_reduction <minsi>, %54, %cst_16 [1] : vector<8x128xi32> to vector<8xi32>
    %56 = vector.shape_cast %55 : vector<8xi32> to vector<8x1xi32>
    %57 = vector.broadcast %56 : vector<8x1xi32> to vector<8x128xi32>
    %58 = arith.cmpi eq, %3, %57 : vector<8x128xi32>
    %59 = arith.extui %58 : vector<8x128xi1> to vector<8x128xi32>
    %60 = arith.sitofp %59 : vector<8x128xi32> to vector<8x128xf32>
    %61 = arith.addf %46, %60 : vector<8x128xf32>
    %cst_17 = arith.constant 0xFF800000 : f32
    %62 = vector.broadcast %cst_17 : f32 to vector<8x128xf32>
    %63 = arith.select %58, %62, %48 : vector<8x128xi1>, vector<8x128xf32>
    %cst_18 = arith.constant dense<0xFF800000> : vector<8xf32>
    %64 = vector.multi_reduction <maximumf>, %63, %cst_18 [1] : vector<8x128xf32> to vector<8xf32>
    %65 = vector.shape_cast %64 : vector<8xf32> to vector<8x1xf32>
    %66 = vector.broadcast %65 : vector<8x1xf32> to vector<8x128xf32>
    %67 = arith.cmpf oeq, %63, %66 : vector<8x128xf32>
    %c128_i32_19 = arith.constant 128 : i32
    %68 = vector.broadcast %c128_i32_19 : i32 to vector<8x128xi32>
    %69 = arith.select %67, %3, %68 : vector<8x128xi1>, vector<8x128xi32>
    %cst_20 = arith.constant dense<2147483647> : vector<8xi32>
    %70 = vector.multi_reduction <minsi>, %69, %cst_20 [1] : vector<8x128xi32> to vector<8xi32>
    %71 = vector.shape_cast %70 : vector<8xi32> to vector<8x1xi32>
    %72 = vector.broadcast %71 : vector<8x1xi32> to vector<8x128xi32>
    %73 = arith.cmpi eq, %3, %72 : vector<8x128xi32>
    %74 = arith.extui %73 : vector<8x128xi1> to vector<8x128xi32>
    %75 = arith.sitofp %74 : vector<8x128xi32> to vector<8x128xf32>
    %76 = arith.addf %61, %75 : vector<8x128xf32>
    %cst_21 = arith.constant 0xFF800000 : f32
    %77 = vector.broadcast %cst_21 : f32 to vector<8x128xf32>
    %78 = arith.select %73, %77, %63 : vector<8x128xi1>, vector<8x128xf32>
    %cst_22 = arith.constant dense<0xFF800000> : vector<8xf32>
    %79 = vector.multi_reduction <maximumf>, %78, %cst_22 [1] : vector<8x128xf32> to vector<8xf32>
    %80 = vector.shape_cast %79 : vector<8xf32> to vector<8x1xf32>
    %81 = vector.broadcast %80 : vector<8x1xf32> to vector<8x128xf32>
    %82 = arith.cmpf oeq, %78, %81 : vector<8x128xf32>
    %c128_i32_23 = arith.constant 128 : i32
    %83 = vector.broadcast %c128_i32_23 : i32 to vector<8x128xi32>
    %84 = arith.select %82, %3, %83 : vector<8x128xi1>, vector<8x128xi32>
    %cst_24 = arith.constant dense<2147483647> : vector<8xi32>
    %85 = vector.multi_reduction <minsi>, %84, %cst_24 [1] : vector<8x128xi32> to vector<8xi32>
    %86 = vector.shape_cast %85 : vector<8xi32> to vector<8x1xi32>
    %87 = vector.broadcast %86 : vector<8x1xi32> to vector<8x128xi32>
    %88 = arith.cmpi eq, %3, %87 : vector<8x128xi32>
    %89 = arith.extui %88 : vector<8x128xi1> to vector<8x128xi32>
    %90 = arith.sitofp %89 : vector<8x128xi32> to vector<8x128xf32>
    %91 = arith.addf %76, %90 : vector<8x128xf32>
    %cst_25 = arith.constant 0xFF800000 : f32
    %92 = vector.broadcast %cst_25 : f32 to vector<8x128xf32>
    %93 = arith.select %88, %92, %78 : vector<8x128xi1>, vector<8x128xf32>
    %cst_26 = arith.constant dense<0xFF800000> : vector<8xf32>
    %94 = vector.multi_reduction <maximumf>, %93, %cst_26 [1] : vector<8x128xf32> to vector<8xf32>
    %95 = vector.shape_cast %94 : vector<8xf32> to vector<8x1xf32>
    %96 = vector.broadcast %95 : vector<8x1xf32> to vector<8x128xf32>
    %97 = arith.cmpf oeq, %93, %96 : vector<8x128xf32>
    %c128_i32_27 = arith.constant 128 : i32
    %98 = vector.broadcast %c128_i32_27 : i32 to vector<8x128xi32>
    %99 = arith.select %97, %3, %98 : vector<8x128xi1>, vector<8x128xi32>
    %cst_28 = arith.constant dense<2147483647> : vector<8xi32>
    %100 = vector.multi_reduction <minsi>, %99, %cst_28 [1] : vector<8x128xi32> to vector<8xi32>
    %101 = vector.shape_cast %100 : vector<8xi32> to vector<8x1xi32>
    %102 = vector.broadcast %101 : vector<8x1xi32> to vector<8x128xi32>
    %103 = arith.cmpi eq, %3, %102 : vector<8x128xi32>
    %104 = arith.extui %103 : vector<8x128xi1> to vector<8x128xi32>
    %105 = arith.sitofp %104 : vector<8x128xi32> to vector<8x128xf32>
    %106 = arith.addf %91, %105 : vector<8x128xf32>
    %c0_i32 = arith.constant 0 : i32
    %107 = vector.broadcast %c0_i32 : i32 to vector<8x1xi32>
    %cst_29 = arith.constant 0.000000e+00 : f32
    %108 = vector.broadcast %cst_29 : f32 to vector<8x1xf32>
    %109 = tpu.concatenate %26, %41, %56, %71, %86, %101, %107, %107 in 1 : vector<8x1xi32>, vector<8x1xi32>, vector<8x1xi32>, vector<8x1xi32>, vector<8x1xi32>, vector<8x1xi32>, vector<8x1xi32>, vector<8x1xi32> -> vector<8x8xi32>
    %c0_30 = arith.constant 0 : index
    %c0_31 = arith.constant 0 : index
    %110 = vector.load %arg3[%c0_30, %c0_31] : memref<8x8xi32, #tpu.memory_space<vmem>>, vector<8x8xi32>
    tpu.vector_store %arg3[%c0_30, %c0_31], %109 {strides = array<i32>} : memref<8x8xi32, #tpu.memory_space<vmem>>, vector<8x8xi32>,
    %111 = tpu.concatenate %20, %35, %50, %65, %80, %95, %108, %108 in 1 : vector<8x1xf32>, vector<8x1xf32>, vector<8x1xf32>, vector<8x1xf32>, vector<8x1xf32>, vector<8x1xf32>, vector<8x1xf32>, vector<8x1xf32> -> vector<8x8xf32>
    %c0_32 = arith.constant 0 : index
    %c0_33 = arith.constant 0 : index
    %112 = vector.load %arg4[%c0_32, %c0_33] : memref<8x8xf32, #tpu.memory_space<vmem>>, vector<8x8xf32>
    tpu.vector_store %arg4[%c0_32, %c0_33], %111 {strides = array<i32>} : memref<8x8xf32, #tpu.memory_space<vmem>>, vector<8x8xf32>,
    %cst_34 = arith.constant dense<0.000000e+00> : vector<128xf32>
    %113 = vector.multi_reduction <add>, %106, %cst_34 [0] : vector<8x128xf32> to vector<128xf32>
    %114 = vector.shape_cast %113 : vector<128xf32> to vector<1x128xf32>
    %c0_35 = arith.constant 0 : index
    %c0_36 = arith.constant 0 : index
    %c0_37 = arith.constant 0 : index
    %115 = vector.load %arg5[%c0_35, %c0_36, %c0_37] : memref<1x1x128xf32, #tpu.memory_space<vmem>>, vector<1x1x128xf32>
    %116 = vector.shape_cast %115 : vector<1x1x128xf32> to vector<1x128xf32>
    %117 = vector.shape_cast %114 : vector<1x128xf32> to vector<1x1x128xf32>
    tpu.vector_store %arg5[%c0_35, %c0_36, %c0_37], %117 {strides = array<i32>} : memref<1x1x128xf32, #tpu.memory_space<vmem>>, vector<1x1x128xf32>,
    %cst_38 = arith.constant dense<0.000000e+00> : vector<128xf32>
    %118 = vector.multi_reduction <add>, %17, %cst_38 [0] : vector<8x128xf32> to vector<128xf32>
    %119 = vector.shape_cast %118 : vector<128xf32> to vector<1x128xf32>
    %c0_39 = arith.constant 0 : index
    %c0_40 = arith.constant 0 : index
    %c0_41 = arith.constant 0 : index
    %120 = vector.load %arg6[%c0_39, %c0_40, %c0_41] : memref<1x1x128xf32, #tpu.memory_space<vmem>>, vector<1x1x128xf32>
    %121 = vector.shape_cast %120 : vector<1x1x128xf32> to vector<1x128xf32>
    %122 = vector.shape_cast %119 : vector<1x128xf32> to vector<1x1x128xf32>
    tpu.vector_store %arg6[%c0_39, %c0_40, %c0_41], %122 {strides = array<i32>} : memref<1x1x128xf32, #tpu.memory_space<vmem>>, vector<1x1x128xf32>,
    return
  }
  func.func @transform_0(%arg0: i32) -> (i32, i32) {
    %c0_i32 = arith.constant 0 : i32
    %c0_i32_0 = arith.constant 0 : i32
    return %arg0, %c0_i32 : i32, i32
  }
  func.func @transform_1(%arg0: i32) -> (i32, i32) {
    %c0_i32 = arith.constant 0 : i32
    %c0_i32_0 = arith.constant 0 : i32
    %c0_i32_1 = arith.constant 0 : i32
    return %c0_i32, %c0_i32_0 : i32, i32
  }
  func.func @transform_2(%arg0: i32) -> (i32, i32) {
    %c0_i32 = arith.constant 0 : i32
    %c0_i32_0 = arith.constant 0 : i32
    return %arg0, %c0_i32 : i32, i32
  }
  func.func @transform_3(%arg0: i32) -> (i32, i32) {
    %c0_i32 = arith.constant 0 : i32
    %c0_i32_0 = arith.constant 0 : i32
    return %arg0, %c0_i32 : i32, i32
  }
  func.func @transform_4(%arg0: i32) -> (i32, i32, i32) {
    %c0_i32 = arith.constant 0 : i32
    %c0_i32_0 = arith.constant 0 : i32
    %c0_i32_1 = arith.constant 0 : i32
    return %arg0, %c0_i32, %c0_i32_0 : i32, i32, i32
  }
  func.func @transform_5(%arg0: i32) -> (i32, i32, i32) {
    %c0_i32 = arith.constant 0 : i32
    %c0_i32_0 = arith.constant 0 : i32
    %c0_i32_1 = arith.constant 0 : i32
    return %arg0, %c0_i32, %c0_i32_0 : i32, i32, i32
  }
}

</mosaic_0001>

<llo_original>
// kernel: tpu_custom_call.1
$region0: #{tpu_custom_call.1}
  #allocation0 [shape = 'u32[]', space=smem, size = 0x4, offset = 0x4, fixed_abs, tag = 'smem constant byte address 0x4 - core index']
  #allocation1 [shape = 'u32[144,128]{1,0:T(1,128)}', space=vmem, size = 0x12000, scoped, tag = 'internal scratch']
  %s0 = inlined_call_operand.hbm [shape: f32[16,32], index: 0, kind: input, shape index: {}]
  %s1 = inlined_call_operand.hbm [shape: f32[32,128], index: 1, kind: input, shape index: {}]
  %s2 = inlined_call_operand.vmem [shape: s32[16,8], index: 2, kind: output, shape index: {0}]
  %s3 = inlined_call_operand.vmem [shape: f32[16,8], index: 3, kind: output, shape index: {1}]
  %s4 = inlined_call_operand.hbm [shape: f32[2,1,128], index: 4, kind: output, shape index: {2}]
  %s5 = inlined_call_operand.hbm [shape: f32[2,1,128], index: 5, kind: output, shape index: {3}]
  %6 = xla_tuple %s2, %s3, %s4, %s5
  %s7 = sld [smem:[#allocation0]]
  $region73: #{tpu_custom_call.1} parent=0
    _
  %s9 = ssub.s32 1, %s7
  %s10 = scalar_select 0, %s9, %s7
  $region1: #{tpu_custom_call.1} parent=0
    #allocation2 [shape = 'u8[8192]{0}', space=vmem, size = 0x2000, scoped, tag = 'input window, operand 0']
    #allocation3 [shape = 's32[2]{0}', space=sflag, size = 0x8, scoped, tag = 'scoped memory for tpu_custom_call.1']
    #allocation4 [shape = 's32[2]{0}', space=sflag, size = 0x8, scoped, tag = 'scoped memory for tpu_custom_call.1']
    #allocation5 [shape = 'u8[16384]{0}', space=vmem, size = 0x4000, scoped, tag = 'input window, operand 1, single buffered']
    #allocation6 [shape = 's32[1]{0}', space=sflag, size = 0x4, scoped, tag = 'scoped memory for tpu_custom_call.1']
    #allocation7 [shape = 'u8[1024]{0}', space=vmem, size = 0x400, scoped, tag = 'output window, operand 2']
    #allocation8 [shape = 'u8[1024]{0}', space=vmem, size = 0x400, scoped, tag = 'output window, operand 3']
    #allocation9 [shape = 's32[2]{0}', space=sflag, size = 0x8, scoped, tag = 'scoped memory for tpu_custom_call.1']
    %11 = vsyncpa [#allocation3], 0
    %s12 = scalar_lea.sflag [#allocation3], 1
    %13 = vsyncpa %s12, 0
    %14 = vsyncpa [#allocation6], 0
    %15 = vsyncpa [#allocation4], 0
    %s16 = scalar_lea.sflag [#allocation4], 1
    %17 = vsyncpa %s16, 0
    %18 = vsyncpa [#allocation9], 0
    %s19 = scalar_lea.sflag [#allocation9], 1
    %20 = vsyncpa %s19, 0
    loop: start=0, step=1, limit=4
    $region2: #{tpu_custom_call.1} parent=1 // loop_pre_header
      _
    $region3: #{tpu_custom_call.1} parent=1 // loop_header
      %s22 = sphi 0, %s26
      %p23 = scmp.ge.s32.totalorder %s22, 4
      %s32 = sphi 0, %s34
      %s35 = sphi 0, %s32
      %s36 = sphi 0, %s35
      %s52 = sphi 0, %s36
      %s56 = sphi 0, %s56
      %s58 = sphi 0, %s56
      %s59 = sphi 0, %s58
      %s73 = sphi 0, %s59
      %s79 = sphi 0, %s81
      %s82 = sphi 0, %s79
      %s83 = sphi 0, %s82
      %s99 = sphi 0, %s83
      %s105 = sphi 0, %s107
      %s108 = sphi 0, %s105
      %s109 = sphi 0, %s108
      %s125 = sphi 0, %s109
      %s131 = sphi 0, %s133
      %s134 = sphi 0, %s131
      %s135 = sphi 0, %s134
      %s151 = sphi 0, %s135
      %s157 = sphi 0, %s159
      %s160 = sphi 0, %s157
      %s161 = sphi 0, %s160
      %s177 = sphi 0, %s161
    $region4: #{tpu_custom_call.1} parent=1 // loop_header_branch
      %25 = sbr.rel (%p23) target = $region8
    $region5: #{tpu_custom_call.1} parent=1 // loop_body
      %s27 = ssub.s32 %s22, 1
      %s28 = ssub.s32 %s22, 2
      %s29 = sadd.s32 %s22, 1
      %s30 = ssub.s32 %s22, %s29
      %p31 = scmp.eq.s32.totalorder %s30, 0
      %s33 = sadd.s32 %s32, 1
      %s34 = scalar_select %p31, %s32, %s33
      %p37 = pneg %p31
      %p38 = scmp.eq.s32.totalorder %s22, 1
      %p39 = por %p37, %p38
      %p40 = scmp.ne.s32.totalorder %s32, %s35
      %p41 = scmp.eq.s32.totalorder %s22, 0
      %p42 = por %p40, %p41
      %p43 = scmp.ne.s32.totalorder %s32, %s35
      %p44 = scmp.eq.s32.totalorder %s27, 1
      %p45 = por %p43, %p44
      %p46 = scmp.ne.s32.totalorder %s35, %s36
      %p47 = scmp.eq.s32.totalorder %s27, 0
      %p48 = por %p46, %p47
      %p49 = scmp.ne.s32.totalorder %s35, %s36
      %p50 = scmp.eq.s32.totalorder %s28, 1
      %p51 = por %p49, %p50
      %p53 = scmp.ne.s32.totalorder %s36, %s52
      %p54 = scmp.eq.s32.totalorder %s28, 0
      %p55 = por %p53, %p54
      %s57 = sadd.s32 %s56, 1
      %p60 = scmp.eq.s32.totalorder %s22, 1
      %p61 = scmp.ne.s32.totalorder %s56, %s58
      %p62 = scmp.eq.s32.totalorder %s22, 0
      %p63 = por %p61, %p62
      %p64 = scmp.ne.s32.totalorder %s56, %s58
      %p65 = scmp.eq.s32.totalorder %s27, 1
      %p66 = por %p64, %p65
      %p67 = scmp.ne.s32.totalorder %s58, %s59
      %p68 = scmp.eq.s32.totalorder %s27, 0
      %p69 = por %p67, %p68
      %p70 = scmp.ne.s32.totalorder %s58, %s59
      %p71 = scmp.eq.s32.totalorder %s28, 1
      %p72 = por %p70, %p71
      %p74 = scmp.ne.s32.totalorder %s59, %s73
      %p75 = scmp.eq.s32.totalorder %s28, 0
      %p76 = por %p74, %p75
      %s77 = ssub.s32 %s22, %s29
      %p78 = scmp.eq.s32.totalorder %s77, 0
      %s80 = sadd.s32 %s79, 1
      %s81 = scalar_select %p78, %s79, %s80
      %p84 = pneg %p78
      %p85 = scmp.eq.s32.totalorder %s22, 1
      %p86 = por %p84, %p85
      %p87 = scmp.ne.s32.totalorder %s79, %s82
      %p88 = scmp.eq.s32.totalorder %s22, 0
      %p89 = por %p87, %p88
      %p90 = scmp.ne.s32.totalorder %s79, %s82
      %p91 = scmp.eq.s32.totalorder %s27, 1
      %p92 = por %p90, %p91
      %p93 = scmp.ne.s32.totalorder %s82, %s83
      %p94 = scmp.eq.s32.totalorder %s27, 0
      %p95 = por %p93, %p94
      %p96 = scmp.ne.s32.totalorder %s82, %s83
      %p97 = scmp.eq.s32.totalorder %s28, 1
      %p98 = por %p96, %p97
      %p100 = scmp.ne.s32.totalorder %s83, %s99
      %p101 = scmp.eq.s32.totalorder %s28, 0
      %p102 = por %p100, %p101
      %s103 = ssub.s32 %s22, %s29
      %p104 = scmp.eq.s32.totalorder %s103, 0
      %s106 = sadd.s32 %s105, 1
      %s107 = scalar_select %p104, %s105, %s106
      %p110 = pneg %p104
      %p111 = scmp.eq.s32.totalorder %s22, 1
      %p112 = por %p110, %p111
      %p113 = scmp.ne.s32.totalorder %s105, %s108
      %p114 = scmp.eq.s32.totalorder %s22, 0
      %p115 = por %p113, %p114
      %p116 = scmp.ne.s32.totalorder %s105, %s108
      %p117 = scmp.eq.s32.totalorder %s27, 1
      %p118 = por %p116, %p117
      %p119 = scmp.ne.s32.totalorder %s108, %s109
      %p120 = scmp.eq.s32.totalorder %s27, 0
      %p121 = por %p119, %p120
      %p122 = scmp.ne.s32.totalorder %s108, %s109
      %p123 = scmp.eq.s32.totalorder %s28, 1
      %p124 = por %p122, %p123
      %p126 = scmp.ne.s32.totalorder %s109, %s125
      %p127 = scmp.eq.s32.totalorder %s28, 0
      %p128 = por %p126, %p127
      %s129 = ssub.s32 %s22, %s29
      %p130 = scmp.eq.s32.totalorder %s129, 0
      %s132 = sadd.s32 %s131, 1
      %s133 = scalar_select %p130, %s131, %s132
      %p136 = pneg %p130
      %p137 = scmp.eq.s32.totalorder %s22, 1
      %p138 = por %p136, %p137
      %p139 = scmp.ne.s32.totalorder %s131, %s134
      %p140 = scmp.eq.s32.totalorder %s22, 0
      %p141 = por %p139, %p140
      %p142 = scmp.ne.s32.totalorder %s131, %s134
      %p143 = scmp.eq.s32.totalorder %s27, 1
      %p144 = por %p142, %p143
      %p145 = scmp.ne.s32.totalorder %s134, %s135
      %p146 = scmp.eq.s32.totalorder %s27, 0
      %p147 = por %p145, %p146
      %p148 = scmp.ne.s32.totalorder %s134, %s135
      %p149 = scmp.eq.s32.totalorder %s28, 1
      %p150 = por %p148, %p149
      %p152 = scmp.ne.s32.totalorder %s135, %s151
      %p153 = scmp.eq.s32.totalorder %s28, 0
      %p154 = por %p152, %p153
      %s155 = ssub.s32 %s22, %s29
      %p156 = scmp.eq.s32.totalorder %s155, 0
      %s158 = sadd.s32 %s157, 1
      %s159 = scalar_select %p156, %s157, %s158
      %p162 = pneg %p156
      %p163 = scmp.eq.s32.totalorder %s22, 1
      %p164 = por %p162, %p163
      %p165 = scmp.ne.s32.totalorder %s157, %s160
      %p166 = scmp.eq.s32.totalorder %s22, 0
      %p167 = por %p165, %p166
      %p168 = scmp.ne.s32.totalorder %s157, %s160
      %p169 = scmp.eq.s32.totalorder %s27, 1
      %p170 = por %p168, %p169
      %p171 = scmp.ne.s32.totalorder %s160, %s161
      %p172 = scmp.eq.s32.totalorder %s27, 0
      %p173 = por %p171, %p172
      %p174 = scmp.ne.s32.totalorder %s160, %s161
      %p175 = scmp.eq.s32.totalorder %s28, 1
      %p176 = por %p174, %p175
      %p178 = scmp.ne.s32.totalorder %s161, %s177
      %p179 = scmp.eq.s32.totalorder %s28, 0
      %p180 = por %p178, %p179
      %p181 = scmp.le.s32.totalorder 1, %s22
      %p182 = scmp.lt.s32.totalorder %s22, 3
      %p183 = pnand %p181, %p182
      %p184 = pneg %p183
      // Predicated region
      $region9: #{tpu_custom_call.1} parent=5 // pred_check
        _
      $region10: #{tpu_custom_call.1} parent=5 // pred_check_branch
        %186 = sbr.rel (%p183) target = $region12
      $region11: #{tpu_custom_call.1} parent=5 // pred_region
        %s187 = ssub.s32 %s22, 1
        // Predicated region
        $region13: #{tpu_custom_call.1} parent=11 // pred_check
          %p188 = pneg %p69
        $region14: #{tpu_custom_call.1} parent=11 // pred_check_branch
          %190 = sbr.rel (%p188) target = $region16
        $region15: #{tpu_custom_call.1} parent=11 // pred_region
          %s192 = ssub.s32 512, 512
          %193 = vsyncadd [#allocation6], %s192
          %s194 = sshll.u32 [#allocation5], 4
          %s195 = int_to_ptr.vmem [resolvable:$true] %s194
          %200 = dma.hbm_to_vmem [thread:$0]  %s1, 512, %s195, [#allocation6], 128, 128, 8
        $region16: #{tpu_custom_call.1} parent=11 // pred_fallthru
          _
      $region12: #{tpu_custom_call.1} parent=5 // pred_fallthru
        _
      %p201 = scmp.lt.s32.totalorder %s22, 2
      // Predicated region
      $region17: #{tpu_custom_call.1} parent=5 // pred_check
        %p202 = pneg %p201
      $region18: #{tpu_custom_call.1} parent=5 // pred_check_branch
        %204 = sbr.rel (%p202) target = $region20
      $region19: #{tpu_custom_call.1} parent=5 // pred_region
        // Predicated region
        $region21: #{tpu_custom_call.1} parent=19 // pred_check
          %p205 = pneg %p42
        $region22: #{tpu_custom_call.1} parent=19 // pred_check_branch
          %207 = sbr.rel (%p205) target = $region24
        $region23: #{tpu_custom_call.1} parent=19 // pred_region
          %s208 = sand.u32 %s32, 1
          %s209 = scalar_lea.sflag [#allocation3], %s208
          %s210 = sand.u32 %s32, 1
          %s211 = smul.addr %s210, 8
          %s212 = scalar_lea.vmem [#allocation2], %s211
          %s214 = ssub.s32 128, 128
          %215 = vsyncadd %s209, %s214
          %s216 = smul.addr %s22, 128
          %s217 = scalar_lea.hbm %s0, %s216
          %s219 = sshll.u32 %s212, 4
          %s220 = int_to_ptr.vmem [resolvable:$true] %s219
          %222 = dma.hbm_to_vmem [thread:$0]  %s217, 128, %s220, %s209
        $region24: #{tpu_custom_call.1} parent=19 // pred_fallthru
          _
      $region20: #{tpu_custom_call.1} parent=5 // pred_fallthru
        _
      %p223 = scmp.le.s32.totalorder 1, %s22
      %p224 = scmp.lt.s32.totalorder %s22, 3
      %p225 = pnand %p223, %p224
      %p226 = pneg %p225
      // Predicated region
      $region25: #{tpu_custom_call.1} parent=5 // pred_check
        _
      $region26: #{tpu_custom_call.1} parent=5 // pred_check_branch
        %228 = sbr.rel (%p225) target = $region28
      $region27: #{tpu_custom_call.1} parent=5 // pred_region
        %s229 = ssub.s32 %s22, 1
        %s230 = sand.u32 %s35, 1
        %s231 = scalar_lea.sflag [#allocation3], %s230
        %s232 = sand.u32 %s35, 1
        %s233 = smul.addr %s232, 8
        %s234 = scalar_lea.vmem [#allocation2], %s233
        // Predicated region
        $region29: #{tpu_custom_call.1} parent=27 // pred_check
          %p235 = pneg %p48
        $region30: #{tpu_custom_call.1} parent=27 // pred_check_branch
          %237 = sbr.rel (%p235) target = $region32
        $region31: #{tpu_custom_call.1} parent=27 // pred_region
          %238 = dma.done %s231, 128
        $region32: #{tpu_custom_call.1} parent=27 // pred_fallthru
          _
        // Predicated region
        $region33: #{tpu_custom_call.1} parent=27 // pred_check
          %p239 = pneg %p69
        $region34: #{tpu_custom_call.1} parent=27 // pred_check_branch
          %241 = sbr.rel (%p239) target = $region36
        $region35: #{tpu_custom_call.1} parent=27 // pred_region
          %242 = dma.done [#allocation6], 512
        $region36: #{tpu_custom_call.1} parent=27 // pred_fallthru
          _
        %s243 = sand.u32 %s35, 1
        %s244 = scalar_lea.sflag [#allocation3], %s243
        %s245 = sand.u32 %s35, 1
        %s246 = smul.addr %s245, 8
        %s247 = scalar_lea.vmem [#allocation2], %s246
        %p248 = pneg %p48
        %p249 = pneg %p45
        %p250 = pneg %p69
        %p251 = pneg %p66
        %p252 = pneg %p95
        %p253 = pneg %p92
        %p254 = scmp.lt.s32.totalorder %s27, 1
        %s255 = scalar_select %p254, %s27, 1
        %s256 = smul.addr %s255, 8
        %s257 = scalar_lea.vmem %s2, %s256
        %p258 = pneg %p121
        %p259 = pneg %p118
        %p260 = scmp.lt.s32.totalorder %s27, 1
        %s261 = scalar_select %p260, %s27, 1
        %s262 = smul.addr %s261, 8
        %s263 = scalar_lea.vmem %s3, %s262
        %p264 = pneg %p147
        %p265 = pneg %p144
        %s266 = sand.u32 %s134, 1
        %s267 = scalar_lea.sflag [#allocation4], %s266
        %s268 = sand.u32 %s134, 1
        %s269 = scalar_lea.vmem [#allocation7], %s268
        %p270 = pneg %p173
        %p271 = pneg %p170
        %s272 = sand.u32 %s160, 1
        %s273 = scalar_lea.sflag [#allocation9], %s272
        %s274 = sand.u32 %s160, 1
        %s275 = scalar_lea.vmem [#allocation8], %s274
        %p276 = scmp.lt.s32.totalorder %s27, 1
        %s277 = scalar_select %p276, %s27, 1
        %s278 = smul.addr %s277, 8
        %s279 = scalar_lea.vmem %s2, %s278
        %p280 = scmp.lt.s32.totalorder %s27, 1
        %s281 = scalar_select %p280, %s27, 1
        %s282 = smul.addr %s281, 8
        %s283 = scalar_lea.vmem %s3, %s282
        %v284 = vld [vmem:[%s234] sm:$0xff]
        %v285 = vld [vmem:[#allocation5] sm:$0xff]
        %v286 = vld [vmem:[#allocation5 + $0x8] sm:$0xff]
        %v287 = vld [vmem:[#allocation5 + $0x10] sm:$0xff]
        %v288 = vld [vmem:[#allocation5 + $0x18] sm:$0xff]
        %vm289 = vcmask 261120
        %v291 = vsel %vm289, %v284, 0
        %293 = vmatprep.subr.mxu0 0.0
        %294 = vmatpush1.msra.mxu0 %v285
        %295 = vmatprep.subr.mxu0 0.0
        %296 = vmatpush1.msra.mxu0 %v286
        %297 = vmatprep.subr.mxu0 0.0
        %298 = vmatpush1.msra.mxu0 %v287
        %299 = vmatprep.subr.mxu0 0.0
        %300 = vmatpush1.msra.mxu0 %v288
        %301 = vmatprep.subr.mxu0 0.0
        %302 = vmatpush1.msra.mxu0 0.0
        %303 = vmatprep.subr.mxu0 0.0
        %304 = vmatpush1.msra.mxu0 0.0
        %305 = vmatprep.subr.mxu0 0.0
        %306 = vmatpush1.msra.mxu0 0.0
        %307 = vmatprep.subr.mxu0 0.0
        %308 = vmatpush1.msra.mxu0 0.0
        %309 = vmatprep.subr.mxu0 0.0
        %310 = vmatpush1.msra.mxu0 0.0
        %311 = vmatprep.subr.mxu0 0.0
        %312 = vmatpush1.msra.mxu0 0.0
        %313 = vmatprep.subr.mxu0 0.0
        %314 = vmatpush1.msra.mxu0 0.0
        %315 = vmatprep.subr.mxu0 0.0
        %316 = vmatpush1.msra.mxu0 0.0
        %317 = vmatprep.subr.mxu0 0.0
        %318 = vmatpush1.msra.mxu0 0.0
        %319 = vmatprep.subr.mxu0 0.0
        %320 = vmatpush1.msra.mxu0 0.0
        %321 = vmatprep.subr.mxu0 0.0
        %322 = vmatpush1.msra.mxu0 0.0
        %323 = vmatprep.subr.mxu0 0.0
        %324 = vmatpush1.msra.mxu0 0.0
        %325 = vmatprep.subr.mxu0 0.0
        %326 = vmatpush1.msra.mxu0 0.0
        %327 = vmatprep.subr.mxu0 0.0
        %328 = vmatpush1.msra.mxu0 0.0
        %329 = vmatprep.subr.mxu0 0.0
        %330 = vmatpush1.msra.mxu0 0.0
        %331 = vmatprep.subr.mxu0 0.0
        %332 = vmatpush1.msra.mxu0 0.0
        %333 = vmatprep.subr.mxu0 0.0
        %334 = vmatpush1.msra.mxu0 0.0
        %335 = vmatprep.subr.mxu0 0.0
        %336 = vmatpush1.msra.mxu0 0.0
        %337 = vmatprep.subr.mxu0 0.0
        %338 = vmatpush1.msra.mxu0 0.0
        %339 = vmatprep.subr.mxu0 0.0
        %340 = vmatpush1.msra.mxu0 0.0
        %341 = vmatprep.subr.mxu0 0.0
        %342 = vmatpush1.msra.mxu0 0.0
        %343 = vmatprep.subr.mxu0 0.0
        %344 = vmatpush1.msra.mxu0 0.0
        %345 = vmatprep.subr.mxu0 0.0
        %346 = vmatpush1.msra.mxu0 0.0
        %347 = vmatprep.subr.mxu0 0.0
        %348 = vmatpush1.msra.mxu0 0.0
        %349 = vmatprep.subr.mxu0 0.0
        %350 = vmatpush1.msra.mxu0 0.0
        %351 = vmatprep.subr.mxu0 0.0
        %352 = vmatpush1.msra.mxu0 0.0
        %353 = vmatprep.subr.mxu0 0.0
        %354 = vmatpush1.msra.mxu0 0.0
        %355 = vmatprep.subr.mxu0 0.0
        %356 = vmatpush1.msra.mxu0 0.0
        %357 = vmatprep.mubr.f32.mxu0 0.0
        %358 = vmatmul.mubr.f32.gmra.mrb[0].mxu0 %v291
        %v359 = vpop.f32.mrb[0].mxu0
        %v360 = vadd.f32 0.0, %v359
        %v361 = vpop.f32.mrb[0].mxu0
        %362 = vdwg.mxu0
        %v363 = vlaneseq
        %v364 = vand.u32 %v363, 127
        %vm365 = vcmp.lt.s32.totalorder %v364, 32
        %v366 = vsel %vm365, %v360, -inf
        %367 = vmax.xlane.f32.xlu0 %v366
        %v368 = vpop.xlane.xlu0 %367
        %v369 = vsub.f32 %v366, %v368
        %v370 = vmul.f32 %v369, 1.442695
        %v371 = vpow.pop %v370
        %372 = vadd.xlane.f32.xlu0 %v371
        %v373 = vpop.xlane.xlu0 %372
        %v374 = vrcp.pop %v373
        %v375 = vmul.f32 %v371, %v374
        %376 = vmax.xlane.f32.xlu0 %v375
        %v377 = vpop.xlane.xlu0 %376
        %vm378 = vcmp.eq.f32.partialorder %v375, %v377
        %v379 = vsel %vm378, %v364, 128
        %v380 = vand.u32 %v379, 65535
        %v381 = vshra.s32 %v379, 16
        %v382 = vcvt.s32.f32 %v380
        %v383 = vcvt.s32.f32 %v381
        %384 = vmin.xlane.f32.xlu0 %v383
        %v385 = vpop.xlane.xlu0 %384
        %vm386 = vcmp.eq.f32.partialorder %v383, %v385
        %v387 = vsel %vm386, %v382, inf
        %388 = vmin.xlane.f32.xlu0 %v387
        %v389 = vpop.xlane.xlu0 %388
        %v390 = vcvt.f32.s32 %v389
        %v391 = vcvt.f32.s32 %v385
        %v392 = vshll.u32 %v391, 16
        %v393 = vadd.s32 %v392, %v390
        %vm394 = vcmp.eq.s32.totalorder %v364, %v393
        %v395 = vsel %vm394, 1, 0
        %v396 = vcvt.s32.f32 %v395
        %v397 = vadd.f32 %v396, 0.0
        %v398 = vsel %vm394, -inf, %v375
        %399 = vmax.xlane.f32.xlu0 %v398
        %v400 = vpop.xlane.xlu0 %399
        %vm401 = vcmp.eq.f32.partialorder %v398, %v400
        %v402 = vsel %vm401, %v364, 128
        %v403 = vand.u32 %v402, 65535
        %v404 = vshra.s32 %v402, 16
        %v405 = vcvt.s32.f32 %v403
        %v406 = vcvt.s32.f32 %v404
        %407 = vmin.xlane.f32.xlu0 %v406
        %v408 = vpop.xlane.xlu0 %407
        %vm409 = vcmp.eq.f32.partialorder %v406, %v408
        %v410 = vsel %vm409, %v405, inf
        %411 = vmin.xlane.f32.xlu0 %v410
        %v412 = vpop.xlane.xlu0 %411
        %v413 = vcvt.f32.s32 %v412
        %v414 = vcvt.f32.s32 %v408
        %v415 = vshll.u32 %v414, 16
        %v416 = vadd.s32 %v415, %v413
        %vm417 = vcmp.eq.s32.totalorder %v364, %v416
        %v418 = vsel %vm417, 1, 0
        %v419 = vcvt.s32.f32 %v418
        %v420 = vadd.f32 %v397, %v419
        %v421 = vsel %vm417, -inf, %v398
        %422 = vmax.xlane.f32.xlu0 %v421
        %v423 = vpop.xlane.xlu0 %422
        %vm424 = vcmp.eq.f32.partialorder %v421, %v423
        %v425 = vsel %vm424, %v364, 128
        %v426 = vand.u32 %v425, 65535
        %v427 = vshra.s32 %v425, 16
        %v428 = vcvt.s32.f32 %v426
        %v429 = vcvt.s32.f32 %v427
        %430 = vmin.xlane.f32.xlu0 %v429
        %v431 = vpop.xlane.xlu0 %430
        %vm432 = vcmp.eq.f32.partialorder %v429, %v431
        %v433 = vsel %vm432, %v428, inf
        %434 = vmin.xlane.f32.xlu0 %v433
        %v435 = vpop.xlane.xlu0 %434
        %v436 = vcvt.f32.s32 %v435
        %v437 = vcvt.f32.s32 %v431
        %v438 = vshll.u32 %v437, 16
        %v439 = vadd.s32 %v438, %v436
        %vm440 = vcmp.eq.s32.totalorder %v364, %v439
        %v441 = vsel %vm440, 1, 0
        %v442 = vcvt.s32.f32 %v441
        %v443 = vadd.f32 %v420, %v442
        %v444 = vsel %vm440, -inf, %v421
        %445 = vmax.xlane.f32.xlu0 %v444
        %v446 = vpop.xlane.xlu0 %445
        %vm447 = vcmp.eq.f32.partialorder %v444, %v446
        %v448 = vsel %vm447, %v364, 128
        %v449 = vand.u32 %v448, 65535
        %v450 = vshra.s32 %v448, 16
        %v451 = vcvt.s32.f32 %v449
        %v452 = vcvt.s32.f32 %v450
        %453 = vmin.xlane.f32.xlu0 %v452
        %v454 = vpop.xlane.xlu0 %453
        %vm455 = vcmp.eq.f32.partialorder %v452, %v454
        %v456 = vsel %vm455, %v451, inf
        %457 = vmin.xlane.f32.xlu0 %v456
        %v458 = vpop.xlane.xlu0 %457
        %v459 = vcvt.f32.s32 %v458
        %v460 = vcvt.f32.s32 %v454
        %v461 = vshll.u32 %v460, 16
        %v462 = vadd.s32 %v461, %v459
        %vm463 = vcmp.eq.s32.totalorder %v364, %v462
        %v464 = vsel %vm463, 1, 0
        %v465 = vcvt.s32.f32 %v464
        %v466 = vadd.f32 %v443, %v465
        %v467 = vsel %vm463, -inf, %v444
        %468 = vmax.xlane.f32.xlu0 %v467
        %v469 = vpop.xlane.xlu0 %468
        %vm470 = vcmp.eq.f32.partialorder %v467, %v469
        %v471 = vsel %vm470, %v364, 128
        %v472 = vand.u32 %v471, 65535
        %v473 = vshra.s32 %v471, 16
        %v474 = vcvt.s32.f32 %v472
        %v475 = vcvt.s32.f32 %v473
        %476 = vmin.xlane.f32.xlu0 %v475
        %v477 = vpop.xlane.xlu0 %476
        %vm478 = vcmp.eq.f32.partialorder %v475, %v477
        %v479 = vsel %vm478, %v474, inf
        %480 = vmin.xlane.f32.xlu0 %v479
        %v481 = vpop.xlane.xlu0 %480
        %v482 = vcvt.f32.s32 %v481
        %v483 = vcvt.f32.s32 %v477
        %v484 = vshll.u32 %v483, 16
        %v485 = vadd.s32 %v484, %v482
        %vm486 = vcmp.eq.s32.totalorder %v364, %v485
        %v487 = vsel %vm486, 1, 0
        %v488 = vcvt.s32.f32 %v487
        %v489 = vadd.f32 %v466, %v488
        %v490 = vsel %vm486, -inf, %v467
        %491 = vmax.xlane.f32.xlu0 %v490
        %v492 = vpop.xlane.xlu0 %491
        %vm493 = vcmp.eq.f32.partialorder %v490, %v492
        %v494 = vsel %vm493, %v364, 128
        %v495 = vand.u32 %v494, 65535
        %v496 = vshra.s32 %v494, 16
        %v497 = vcvt.s32.f32 %v495
        %v498 = vcvt.s32.f32 %v496
        %499 = vmin.xlane.f32.xlu0 %v498
        %v500 = vpop.xlane.xlu0 %499
        %vm501 = vcmp.eq.f32.partialorder %v498, %v500
        %v502 = vsel %vm501, %v497, inf
        %503 = vmin.xlane.f32.xlu0 %v502
        %v504 = vpop.xlane.xlu0 %503
        %v505 = vcvt.f32.s32 %v504
        %v506 = vcvt.f32.s32 %v500
        %v507 = vshll.u32 %v506, 16
        %v508 = vadd.s32 %v507, %v505
        %vm509 = vcmp.eq.s32.totalorder %v364, %v508
        %v510 = vsel %vm509, 1, 0
        %v511 = vcvt.s32.f32 %v510
        %v512 = vadd.f32 %v489, %v511
        %vm513 = vcmask 7168
        %v514 = vsel %vm513, %v393, %v416
        %vm515 = vcmask 15360
        %v516 = vsel %vm515, %v514, %v439
        %vm517 = vcmask 23552
        %v518 = vsel %vm517, %v516, %v462
        %vm519 = vcmask 31744
        %v520 = vsel %vm519, %v518, %v485
        %vm521 = vcmask 39936
        %v522 = vsel %vm521, %v520, %v508
        %vm523 = vcmask 48128
        %v524 = vsel %vm523, %v522, 0
        %vm525 = vcmask 56320
        %v526 = vsel %vm525, %v524, 0
        %vm527 = vcmask 64512
        %528 = vst.msk [vmem:[%s279] sm:$0xff] %vm527, %v526
        %v529 = vsel %vm513, %v377, %v400
        %v530 = vsel %vm515, %v529, %v423
        %v531 = vsel %vm517, %v530, %v446
        %v532 = vsel %vm519, %v531, %v469
        %v533 = vsel %vm521, %v532, %v492
        %v534 = vsel %vm523, %v533, 0.0
        %v535 = vsel %vm525, %v534, 0.0
        %536 = vst.msk [vmem:[%s283] sm:$0xff] %vm527, %v535
        %v537 = vrot.slane %v512, 4
        %v538 = vadd.f32 %v512, %v537
        %v539 = vrot.slane %v538, 2
        %v540 = vadd.f32 %v538, %v539
        %v541 = vrot.slane %v540, 1
        %v542 = vadd.f32 %v540, %v541
        %543 = vst [vmem:[%s269] sm:$0x1] %v542
        %v544 = vrot.slane %v375, 4
        %v545 = vadd.f32 %v375, %v544
        %v546 = vrot.slane %v545, 2
        %v547 = vadd.f32 %v545, %v546
        %v548 = vrot.slane %v547, 1
        %v549 = vadd.f32 %v547, %v548
        %550 = vst [vmem:[%s275] sm:$0x1] %v549
        %p551 = scmp.lt.s32.totalorder %s27, 1
        %s552 = scalar_select %p551, %s27, 1
        %s553 = smul.addr %s552, 8
        %s554 = scalar_lea.vmem %s2, %s553
        %p555 = scmp.lt.s32.totalorder %s27, 1
        %s556 = scalar_select %p555, %s27, 1
        %s557 = smul.addr %s556, 8
        %s558 = scalar_lea.vmem %s3, %s557
        %s559 = sand.u32 %s134, 1
        %s560 = scalar_lea.sflag [#allocation4], %s559
        %s561 = sand.u32 %s134, 1
        %s562 = scalar_lea.vmem [#allocation7], %s561
        %s563 = sand.u32 %s160, 1
        %s564 = scalar_lea.sflag [#allocation9], %s563
        %s565 = sand.u32 %s160, 1
        %s566 = scalar_lea.vmem [#allocation8], %s565
        // Predicated region
        $region37: #{tpu_custom_call.1} parent=27 // pred_check
          %p567 = pneg %p92
        $region38: #{tpu_custom_call.1} parent=27 // pred_check_branch
          %569 = sbr.rel (%p567) target = $region40
        $region39: #{tpu_custom_call.1} parent=27 // pred_region
          _
        $region40: #{tpu_custom_call.1} parent=27 // pred_fallthru
          _
        // Predicated region
        $region41: #{tpu_custom_call.1} parent=27 // pred_check
          %p570 = pneg %p118
        $region42: #{tpu_custom_call.1} parent=27 // pred_check_branch
          %572 = sbr.rel (%p570) target = $region44
        $region43: #{tpu_custom_call.1} parent=27 // pred_region
          _
        $region44: #{tpu_custom_call.1} parent=27 // pred_fallthru
          _
        // Predicated region
        $region45: #{tpu_custom_call.1} parent=27 // pred_check
          %p573 = pneg %p144
        $region46: #{tpu_custom_call.1} parent=27 // pred_check_branch
          %575 = sbr.rel (%p573) target = $region48
        $region47: #{tpu_custom_call.1} parent=27 // pred_region
          %s577 = ssub.s32 16, 16
          %578 = vsyncadd %s560, %s577
          %s579 = smul.addr %s27, 16
          %s580 = scalar_lea.hbm %s4, %s579
          %s582 = sshll.u32 %s562, 4
          %s583 = int_to_ptr.vmem [resolvable:$true] %s582
          %585 = dma.vmem_to_hbm [thread:$0]  %s583, 16, %s580, %s560
        $region48: #{tpu_custom_call.1} parent=27 // pred_fallthru
          _
        // Predicated region
        $region49: #{tpu_custom_call.1} parent=27 // pred_check
          %p586 = pneg %p170
        $region50: #{tpu_custom_call.1} parent=27 // pred_check_branch
          %588 = sbr.rel (%p586) target = $region52
        $region51: #{tpu_custom_call.1} parent=27 // pred_region
          %s590 = ssub.s32 16, 16
          %591 = vsyncadd %s564, %s590
          %s592 = smul.addr %s27, 16
          %s593 = scalar_lea.hbm %s5, %s592
          %s595 = sshll.u32 %s566, 4
          %s596 = int_to_ptr.vmem [resolvable:$true] %s595
          %598 = dma.vmem_to_hbm [thread:$0]  %s596, 16, %s593, %s564
        $region52: #{tpu_custom_call.1} parent=27 // pred_fallthru
          _
      $region28: #{tpu_custom_call.1} parent=5 // pred_fallthru
        _
      %p599 = scmp.le.s32.totalorder 2, %s22
      // Predicated region
      $region53: #{tpu_custom_call.1} parent=5 // pred_check
        %p600 = pneg %p599
      $region54: #{tpu_custom_call.1} parent=5 // pred_check_branch
        %602 = sbr.rel (%p600) target = $region56
      $region55: #{tpu_custom_call.1} parent=5 // pred_region
        %s603 = ssub.s32 %s22, 2
        // Predicated region
        $region57: #{tpu_custom_call.1} parent=55 // pred_check
          %p604 = pneg %p98
        $region58: #{tpu_custom_call.1} parent=55 // pred_check_branch
          %606 = sbr.rel (%p604) target = $region60
        $region59: #{tpu_custom_call.1} parent=55 // pred_region
          %p607 = scmp.lt.s32.totalorder %s28, 1
          %s608 = scalar_select %p607, %s28, 1
          %s609 = smul.addr %s608, 8
          %s610 = scalar_lea.vmem %s2, %s609
        $region60: #{tpu_custom_call.1} parent=55 // pred_fallthru
          _
        // Predicated region
        $region61: #{tpu_custom_call.1} parent=55 // pred_check
          %p611 = pneg %p124
        $region62: #{tpu_custom_call.1} parent=55 // pred_check_branch
          %613 = sbr.rel (%p611) target = $region64
        $region63: #{tpu_custom_call.1} parent=55 // pred_region
          %p614 = scmp.lt.s32.totalorder %s28, 1
          %s615 = scalar_select %p614, %s28, 1
          %s616 = smul.addr %s615, 8
          %s617 = scalar_lea.vmem %s3, %s616
        $region64: #{tpu_custom_call.1} parent=55 // pred_fallthru
          _
        // Predicated region
        $region65: #{tpu_custom_call.1} parent=55 // pred_check
          %p618 = pneg %p150
        $region66: #{tpu_custom_call.1} parent=55 // pred_check_branch
          %620 = sbr.rel (%p618) target = $region68
        $region67: #{tpu_custom_call.1} parent=55 // pred_region
          %s621 = sand.u32 %s135, 1
          %s622 = scalar_lea.sflag [#allocation4], %s621
          %s623 = sand.u32 %s135, 1
          %s624 = scalar_lea.vmem [#allocation7], %s623
          %625 = dma.done %s622, 16
        $region68: #{tpu_custom_call.1} parent=55 // pred_fallthru
          _
        // Predicated region
        $region69: #{tpu_custom_call.1} parent=55 // pred_check
          %p626 = pneg %p176
        $region70: #{tpu_custom_call.1} parent=55 // pred_check_branch
          %628 = sbr.rel (%p626) target = $region72
        $region71: #{tpu_custom_call.1} parent=55 // pred_region
          %s629 = sand.u32 %s161, 1
          %s630 = scalar_lea.sflag [#allocation9], %s629
          %s631 = sand.u32 %s161, 1
          %s632 = scalar_lea.vmem [#allocation8], %s631
          %633 = dma.done %s630, 16
        $region72: #{tpu_custom_call.1} parent=55 // pred_fallthru
          _
      $region56: #{tpu_custom_call.1} parent=5 // pred_fallthru
        _
    $region6: #{tpu_custom_call.1} parent=1 // loop_footer
      %s26 = sadd.s32 1, %s22
    $region7: #{tpu_custom_call.1} parent=1 // loop_footer_branch
      %21 = sbr.rel target = $region3
    $region8: #{tpu_custom_call.1} parent=1 // loop_exit
      _
    %634 = vsyncpa [#allocation3], 1
    %s635 = scalar_lea.sflag [#allocation3], 1
    %636 = vsyncpa %s635, 1
    %637 = vsyncpa [#allocation6], 1
    %638 = vsyncpa [#allocation4], 1
    %s639 = scalar_lea.sflag [#allocation4], 1
    %640 = vsyncpa %s639, 1
    %641 = vsyncpa [#allocation9], 1
    %s642 = scalar_lea.sflag [#allocation9], 1
    %643 = vsyncpa %s642, 1

</llo_original>
